<compile_context>
chip_gen: v5e
topology: v5e:2x2
jax: 0.10.0
libtpu: 0.0.40
codegen_flags: <defaults>
</compile_context>

<pallas_src>
import functools

import jax
import jax.numpy as jnp
from jax.experimental import pallas as pl
from jax.experimental.pallas import tpu as pltpu

_LANE = 128
_ANCHOR_PAD = 1024          # pad A so R = A_pad // 128 is a multiple of 8
_BISECT_STEPS = 32          # resolves the full non-negative f32 bit range


def _smooth_l1(a, b):
    d = a - b
    ad = jnp.abs(d)
    return jnp.where(ad < 1.0, 0.5 * d * d, ad - 0.5)


def facebox_loss_kernel(loc_p_ref, loc_t_ref, conf_ref, tgt_ref, out_ref, *, num_boxes):
    # Per grid step (one batch element):
    #   loc_p_ref / loc_t_ref : [4, R, 128] f32   (coordinate, sublane, lane)
    #   conf_ref              : [2, R, 128] f32   (class, sublane, lane)
    #   tgt_ref               : [R, 128]    int32 (zero-padded anchors)
    #   out_ref               : [8, 128]    f32   partial sums at [0, 0:3]
    R, L = tgt_ref.shape

    # validity mask for the padded anchor tail (anchor index = sublane*128 + lane)
    sub = jax.lax.broadcasted_iota(jnp.int32, (R, L), 0)
    lane = jax.lax.broadcasted_iota(jnp.int32, (R, L), 1)
    valid = (sub * L + lane) < num_boxes

    tgt = tgt_ref[...]
    pos = tgt > 0                                  # padded tgt == 0 -> never positive
    posf = pos.astype(jnp.float32)
    num_pos = jnp.sum(posf)

    # ---- localization loss: smooth L1 (beta=1), summed over positive boxes ----
    sl1_box = (_smooth_l1(loc_p_ref[0], loc_t_ref[0])
               + _smooth_l1(loc_p_ref[1], loc_t_ref[1])
               + _smooth_l1(loc_p_ref[2], loc_t_ref[2])
               + _smooth_l1(loc_p_ref[3], loc_t_ref[3]))
    loc_loss = jnp.sum(sl1_box * posf)

    # ---- per-box 2-class softmax cross-entropy ----
    x0 = conf_ref[0]
    x1 = conf_ref[1]
    lse = jnp.maximum(x0, x1) + jnp.log(1.0 + jnp.exp(-jnp.abs(x0 - x1)))
    x_y = jnp.where(pos, x1, x0)                   # logit of the target class
    ce = jnp.where(valid, lse - x_y, 0.0)          # CE >= 0; padded anchors add 0

    # ---- hard negative mining (k-th-largest threshold via bit bisection) ----
    masked = jnp.where(pos, 0.0, ce)               # zero CE at positives; >= 0
    mbits = pltpu.bitcast(masked, jnp.int32)       # order-preserving for x >= 0
    num_neg = jnp.minimum(3.0 * num_pos, float(num_boxes - 1))

    def bisect(_, carry):
        lo, hi = carry
        mid = lo + ((hi - lo + 1) >> 1)
        cnt = jnp.sum((mbits >= mid).astype(jnp.float32))
        ok = cnt >= num_neg
        return jnp.where(ok, mid, lo), jnp.where(ok, hi, mid - 1)

    thr, _ = jax.lax.fori_loop(
        0, _BISECT_STEPS, bisect,
        (jnp.int32(0), jnp.int32(0x7F800000)))     # upper bound: +inf bit pattern
    neg = jnp.logical_and(mbits >= thr, num_neg >= 1.0)

    sel = jnp.logical_or(pos, neg).astype(jnp.float32)
    conf_loss = jnp.sum(ce * sel)                  # padded/selected anchors add 0

    # ---- write per-batch partial sums into a tile-aligned (8,128) slab ----
    osub = jax.lax.broadcasted_iota(jnp.int32, out_ref.shape, 0)
    olane = jax.lax.broadcasted_iota(jnp.int32, out_ref.shape, 1)
    flat = osub * out_ref.shape[1] + olane
    out_ref[...] = jnp.where(flat == 0, loc_loss,
                             jnp.where(flat == 1, conf_loss,
                                       jnp.where(flat == 2, num_pos, 0.0)))


def facebox_loss(loc_preds, loc_targets, conf_preds, conf_targets):
    """loc_preds/loc_targets: [B, A, 4]; conf_preds: [B, A, 2];
    conf_targets: [B, A] int (0/1). Returns scalar loss."""
    B, A, _ = loc_preds.shape
    a_pad = ((A + _ANCHOR_PAD - 1) // _ANCHOR_PAD) * _ANCHOR_PAD
    pad = a_pad - A
    R = a_pad // _LANE

    # Layout plumbing: coordinate/class dims to the front (one transpose each, no
    # per-class strided slices), anchors padded + reshaped lane/sublane dense.
    loc_p = jnp.transpose(loc_preds.astype(jnp.float32), (2, 0, 1))    # [4, B, A]
    loc_t = jnp.transpose(loc_targets.astype(jnp.float32), (2, 0, 1))  # [4, B, A]
    conf = jnp.transpose(conf_preds.astype(jnp.float32), (2, 0, 1))    # [2, B, A]
    tgt = conf_targets.astype(jnp.int32)                               # [B, A]
    if pad:
        loc_p = jnp.pad(loc_p, ((0, 0), (0, 0), (0, pad)))
        loc_t = jnp.pad(loc_t, ((0, 0), (0, 0), (0, pad)))
        conf = jnp.pad(conf, ((0, 0), (0, 0), (0, pad)))
        tgt = jnp.pad(tgt, ((0, 0), (0, pad)))
    loc_p = loc_p.reshape(4, B, R, _LANE)
    loc_t = loc_t.reshape(4, B, R, _LANE)
    conf = conf.reshape(2, B, R, _LANE)
    tgt = tgt.reshape(B, R, _LANE)

    kernel = functools.partial(facebox_loss_kernel, num_boxes=A)
    partials = pl.pallas_call(
        kernel,
        out_shape=jax.ShapeDtypeStruct((B, 8, _LANE), jnp.float32),
        grid=(B,),
        in_specs=[
            pl.BlockSpec((4, None, R, _LANE), lambda b: (0, b, 0, 0)),
            pl.BlockSpec((4, None, R, _LANE), lambda b: (0, b, 0, 0)),
            pl.BlockSpec((2, None, R, _LANE), lambda b: (0, b, 0, 0)),
            pl.BlockSpec((None, R, _LANE), lambda b: (b, 0, 0)),
        ],
        out_specs=pl.BlockSpec((None, 8, _LANE), lambda b: (b, 0, 0)),
        compiler_params=pltpu.CompilerParams(
            dimension_semantics=("parallel",),       # megacore-shardable on v7x
            vmem_limit_bytes=32 * 1024 * 1024,       # ample headroom; ~1 MB/step used
        ),
    )(loc_p, loc_t, conf, tgt)

    # Trivial scalar combine in JAX (mirrors the num_matched_boxes == 0 early return).
    # TODO(synk): the module's host-side debug print('loc_loss:... conf_loss:...') is omitted.
    loc_loss = jnp.sum(partials[:, 0, 0])
    conf_loss = jnp.sum(partials[:, 0, 1])
    num_pos = jnp.sum(partials[:, 0, 2])
    return jnp.where(num_pos > 0.0,
                     (loc_loss + conf_loss) / jnp.maximum(num_pos, 1.0),
                     0.0)


def reference_loss(loc_preds, loc_targets, conf_preds, conf_targets):
    """Pure-JAX reference mirroring the PyTorch module (incl. sort-based rank)."""
    pos = conf_targets > 0
    posf = pos.astype(jnp.float32)
    N = jnp.sum(posf)

    d = loc_preds - loc_targets
    ad = jnp.abs(d)
    sl1 = jnp.where(ad < 1.0, 0.5 * d * d, ad - 0.5)
    loc_loss = jnp.sum(jnp.sum(sl1, axis=2) * posf)

    lse = jax.scipy.special.logsumexp(conf_preds, axis=2)
    x_y = jnp.take_along_axis(conf_preds, conf_targets[..., None], axis=2)[..., 0]
    ce = lse - x_y

    masked = jnp.where(pos, 0.0, ce)
    idx = jnp.argsort(-masked, axis=1)
    rank = jnp.argsort(idx, axis=1)
    num_pos_b = jnp.sum(pos.astype(jnp.int32), axis=1, keepdims=True)
    num_neg_b = jnp.minimum(3 * num_pos_b, masked.shape[1] - 1)
    neg = rank < num_neg_b

    sel = jnp.logical_or(pos, neg)
    conf_loss = jnp.sum(jnp.where(sel, ce, 0.0))
    return (loc_loss + conf_loss) / N


if __name__ == "__main__":
    key = jax.random.PRNGKey(0)
    k1, k2, k3, k4 = jax.random.split(key, 4)

    B, A = 2, 3000  # small stand-in for [batch, 21824] anchors (exercises padding)
    loc_preds = jax.random.normal(k1, (B, A, 4), jnp.float32)
    loc_targets = jax.random.normal(k2, (B, A, 4), jnp.float32)
    conf_preds = jax.random.normal(k3, (B, A, 2), jnp.float32)
    conf_targets = (jax.random.uniform(k4, (B, A)) < 0.1).astype(jnp.int32)
    # guarantee at least one positive per batch element (deterministic)
    conf_targets = conf_targets.at[:, 0].set(1)

    loss = facebox_loss(loc_preds, loc_targets, conf_preds, conf_targets)
    loss = jax.block_until_ready(loss)

    ref = jax.block_until_ready(
        reference_loss(loc_preds, loc_targets, conf_preds, conf_targets)
    )
    assert abs(float(loss) - float(ref)) <= 1e-3 * max(1.0, abs(float(ref))), (
        float(loss), float(ref))

    print("KERNEL_OK")
</pallas_src>

<mosaic_0001>
module attributes {stable_mosaic.version = 11 : i64} {
  func.func @facebox_loss_kernel(%arg0: i32, %arg1: memref<4x1x24x128xf32, #tpu.memory_space<vmem>>, %arg2: memref<4x1x24x128xf32, #tpu.memory_space<vmem>>, %arg3: memref<2x1x24x128xf32, #tpu.memory_space<vmem>>, %arg4: memref<1x24x128xi32, #tpu.memory_space<vmem>>, %arg5: memref<1x8x128xf32, #tpu.memory_space<vmem>>) attributes {dimension_semantics = [#tpu.dimension_semantics<parallel>], iteration_bounds = array<i64: 2>, scalar_prefetch = 0 : i64, scratch_operands = 0 : i64, tpu.core_type = #tpu.core_type<tc>, window_params = [{transform_indices = @transform_0, window_bounds = array<i64: 4, 1, 24, 128>}, {transform_indices = @transform_1, window_bounds = array<i64: 4, 1, 24, 128>}, {transform_indices = @transform_2, window_bounds = array<i64: 2, 1, 24, 128>}, {transform_indices = @transform_3, window_bounds = array<i64: 1, 24, 128>}, {transform_indices = @transform_4, window_bounds = array<i64: 1, 8, 128>}]} {
    %0 = tpu.iota {dimensions = array<i32: 0>} : vector<24x128xi32>
    %1 = tpu.iota {dimensions = array<i32: 1>} : vector<24x128xi32>
    %c128_i32 = arith.constant 128 : i32
    %2 = vector.broadcast %c128_i32 : i32 to vector<24x128xi32>
    %3 = arith.muli %0, %2 : vector<24x128xi32>
    %4 = arith.addi %3, %1 : vector<24x128xi32>
    %c3000_i32 = arith.constant 3000 : i32
    %5 = vector.broadcast %c3000_i32 : i32 to vector<24x128xi32>
    %6 = arith.cmpi slt, %4, %5 : vector<24x128xi32>
    %c0 = arith.constant 0 : index
    %c0_0 = arith.constant 0 : index
    %c0_1 = arith.constant 0 : index
    %7 = vector.load %arg4[%c0, %c0_0, %c0_1] : memref<1x24x128xi32, #tpu.memory_space<vmem>>, vector<1x24x128xi32>
    %8 = vector.shape_cast %7 : vector<1x24x128xi32> to vector<24x128xi32>
    %c0_i32 = arith.constant 0 : i32
    %9 = vector.broadcast %c0_i32 : i32 to vector<24x128xi32>
    %10 = arith.cmpi sgt, %8, %9 : vector<24x128xi32>
    %11 = arith.extui %10 : vector<24x128xi1> to vector<24x128xi32>
    %12 = arith.sitofp %11 : vector<24x128xi32> to vector<24x128xf32>
    %13 = vector.shape_cast %12 : vector<24x128xf32> to vector<1x24x128xf32>
    %cst = arith.constant dense<0.000000e+00> : vector<1xf32>
    %14 = vector.multi_reduction <add>, %13, %cst [1, 2] : vector<1x24x128xf32> to vector<1xf32>
    %15 = vector.shape_cast %14 : vector<1xf32> to vector<1x1x1xf32>
    %16 = vector.extract %15[0, 0, 0] : f32 from vector<1x1x1xf32>
    %c0_2 = arith.constant 0 : index
    %c0_3 = arith.constant 0 : index
    %c0_4 = arith.constant 0 : index
    %c0_5 = arith.constant 0 : index
    %17 = vector.load %arg1[%c0_2, %c0_3, %c0_4, %c0_5] : memref<4x1x24x128xf32, #tpu.memory_space<vmem>>, vector<1x1x24x128xf32>
    %18 = vector.shape_cast %17 : vector<1x1x24x128xf32> to vector<24x128xf32>
    %c0_6 = arith.constant 0 : index
    %c0_7 = arith.constant 0 : index
    %c0_8 = arith.constant 0 : index
    %c0_9 = arith.constant 0 : index
    %19 = vector.load %arg2[%c0_6, %c0_7, %c0_8, %c0_9] : memref<4x1x24x128xf32, #tpu.memory_space<vmem>>, vector<1x1x24x128xf32>
    %20 = vector.shape_cast %19 : vector<1x1x24x128xf32> to vector<24x128xf32>
    %21 = arith.subf %18, %20 : vector<24x128xf32>
    %22 = math.absf %21 : vector<24x128xf32>
    %cst_10 = arith.constant 1.000000e+00 : f32
    %23 = vector.broadcast %cst_10 : f32 to vector<24x128xf32>
    %24 = arith.cmpf olt, %22, %23 : vector<24x128xf32>
    %cst_11 = arith.constant 5.000000e-01 : f32
    %25 = vector.broadcast %cst_11 : f32 to vector<24x128xf32>
    %26 = arith.mulf %25, %21 : vector<24x128xf32>
    %27 = arith.mulf %26, %21 : vector<24x128xf32>
    %cst_12 = arith.constant 5.000000e-01 : f32
    %28 = vector.broadcast %cst_12 : f32 to vector<24x128xf32>
    %29 = arith.subf %22, %28 : vector<24x128xf32>
    %30 = arith.select %24, %27, %29 : vector<24x128xi1>, vector<24x128xf32>
    %c1 = arith.constant 1 : index
    %c0_13 = arith.constant 0 : index
    %c0_14 = arith.constant 0 : index
    %c0_15 = arith.constant 0 : index
    %31 = vector.load %arg1[%c1, %c0_13, %c0_14, %c0_15] : memref<4x1x24x128xf32, #tpu.memory_space<vmem>>, vector<1x1x24x128xf32>
    %32 = vector.shape_cast %31 : vector<1x1x24x128xf32> to vector<24x128xf32>
    %c1_16 = arith.constant 1 : index
    %c0_17 = arith.constant 0 : index
    %c0_18 = arith.constant 0 : index
    %c0_19 = arith.constant 0 : index
    %33 = vector.load %arg2[%c1_16, %c0_17, %c0_18, %c0_19] : memref<4x1x24x128xf32, #tpu.memory_space<vmem>>, vector<1x1x24x128xf32>
    %34 = vector.shape_cast %33 : vector<1x1x24x128xf32> to vector<24x128xf32>
    %35 = arith.subf %32, %34 : vector<24x128xf32>
    %36 = math.absf %35 : vector<24x128xf32>
    %cst_20 = arith.constant 1.000000e+00 : f32
    %37 = vector.broadcast %cst_20 : f32 to vector<24x128xf32>
    %38 = arith.cmpf olt, %36, %37 : vector<24x128xf32>
    %cst_21 = arith.constant 5.000000e-01 : f32
    %39 = vector.broadcast %cst_21 : f32 to vector<24x128xf32>
    %40 = arith.mulf %39, %35 : vector<24x128xf32>
    %41 = arith.mulf %40, %35 : vector<24x128xf32>
    %cst_22 = arith.constant 5.000000e-01 : f32
    %42 = vector.broadcast %cst_22 : f32 to vector<24x128xf32>
    %43 = arith.subf %36, %42 : vector<24x128xf32>
    %44 = arith.select %38, %41, %43 : vector<24x128xi1>, vector<24x128xf32>
    %45 = arith.addf %30, %44 : vector<24x128xf32>
    %c2 = arith.constant 2 : index
    %c0_23 = arith.constant 0 : index
    %c0_24 = arith.constant 0 : index
    %c0_25 = arith.constant 0 : index
    %46 = vector.load %arg1[%c2, %c0_23, %c0_24, %c0_25] : memref<4x1x24x128xf32, #tpu.memory_space<vmem>>, vector<1x1x24x128xf32>
    %47 = vector.shape_cast %46 : vector<1x1x24x128xf32> to vector<24x128xf32>
    %c2_26 = arith.constant 2 : index
    %c0_27 = arith.constant 0 : index
    %c0_28 = arith.constant 0 : index
    %c0_29 = arith.constant 0 : index
    %48 = vector.load %arg2[%c2_26, %c0_27, %c0_28, %c0_29] : memref<4x1x24x128xf32, #tpu.memory_space<vmem>>, vector<1x1x24x128xf32>
    %49 = vector.shape_cast %48 : vector<1x1x24x128xf32> to vector<24x128xf32>
    %50 = arith.subf %47, %49 : vector<24x128xf32>
    %51 = math.absf %50 : vector<24x128xf32>
    %cst_30 = arith.constant 1.000000e+00 : f32
    %52 = vector.broadcast %cst_30 : f32 to vector<24x128xf32>
    %53 = arith.cmpf olt, %51, %52 : vector<24x128xf32>
    %cst_31 = arith.constant 5.000000e-01 : f32
    %54 = vector.broadcast %cst_31 : f32 to vector<24x128xf32>
    %55 = arith.mulf %54, %50 : vector<24x128xf32>
    %56 = arith.mulf %55, %50 : vector<24x128xf32>
    %cst_32 = arith.constant 5.000000e-01 : f32
    %57 = vector.broadcast %cst_32 : f32 to vector<24x128xf32>
    %58 = arith.subf %51, %57 : vector<24x128xf32>
    %59 = arith.select %53, %56, %58 : vector<24x128xi1>, vector<24x128xf32>
    %60 = arith.addf %45, %59 : vector<24x128xf32>
    %c3 = arith.constant 3 : index
    %c0_33 = arith.constant 0 : index
    %c0_34 = arith.constant 0 : index
    %c0_35 = arith.constant 0 : index
    %61 = vector.load %arg1[%c3, %c0_33, %c0_34, %c0_35] : memref<4x1x24x128xf32, #tpu.memory_space<vmem>>, vector<1x1x24x128xf32>
    %62 = vector.shape_cast %61 : vector<1x1x24x128xf32> to vector<24x128xf32>
    %c3_36 = arith.constant 3 : index
    %c0_37 = arith.constant 0 : index
    %c0_38 = arith.constant 0 : index
    %c0_39 = arith.constant 0 : index
    %63 = vector.load %arg2[%c3_36, %c0_37, %c0_38, %c0_39] : memref<4x1x24x128xf32, #tpu.memory_space<vmem>>, vector<1x1x24x128xf32>
    %64 = vector.shape_cast %63 : vector<1x1x24x128xf32> to vector<24x128xf32>
    %65 = arith.subf %62, %64 : vector<24x128xf32>
    %66 = math.absf %65 : vector<24x128xf32>
    %cst_40 = arith.constant 1.000000e+00 : f32
    %67 = vector.broadcast %cst_40 : f32 to vector<24x128xf32>
    %68 = arith.cmpf olt, %66, %67 : vector<24x128xf32>
    %cst_41 = arith.constant 5.000000e-01 : f32
    %69 = vector.broadcast %cst_41 : f32 to vector<24x128xf32>
    %70 = arith.mulf %69, %65 : vector<24x128xf32>
    %71 = arith.mulf %70, %65 : vector<24x128xf32>
    %cst_42 = arith.constant 5.000000e-01 : f32
    %72 = vector.broadcast %cst_42 : f32 to vector<24x128xf32>
    %73 = arith.subf %66, %72 : vector<24x128xf32>
    %74 = arith.select %68, %71, %73 : vector<24x128xi1>, vector<24x128xf32>
    %75 = arith.addf %60, %74 : vector<24x128xf32>
    %76 = arith.mulf %75, %12 : vector<24x128xf32>
    %77 = vector.shape_cast %76 : vector<24x128xf32> to vector<1x24x128xf32>
    %cst_43 = arith.constant dense<0.000000e+00> : vector<1xf32>
    %78 = vector.multi_reduction <add>, %77, %cst_43 [1, 2] : vector<1x24x128xf32> to vector<1xf32>
    %79 = vector.shape_cast %78 : vector<1xf32> to vector<1x1x1xf32>
    %80 = vector.extract %79[0, 0, 0] : f32 from vector<1x1x1xf32>
    %c0_44 = arith.constant 0 : index
    %c0_45 = arith.constant 0 : index
    %c0_46 = arith.constant 0 : index
    %c0_47 = arith.constant 0 : index
    %81 = vector.load %arg3[%c0_44, %c0_45, %c0_46, %c0_47] : memref<2x1x24x128xf32, #tpu.memory_space<vmem>>, vector<1x1x24x128xf32>
    %82 = vector.shape_cast %81 : vector<1x1x24x128xf32> to vector<24x128xf32>
    %c1_48 = arith.constant 1 : index
    %c0_49 = arith.constant 0 : index
    %c0_50 = arith.constant 0 : index
    %c0_51 = arith.constant 0 : index
    %83 = vector.load %arg3[%c1_48, %c0_49, %c0_50, %c0_51] : memref<2x1x24x128xf32, #tpu.memory_space<vmem>>, vector<1x1x24x128xf32>
    %84 = vector.shape_cast %83 : vector<1x1x24x128xf32> to vector<24x128xf32>
    %85 = arith.maximumf %82, %84 : vector<24x128xf32>
    %86 = arith.subf %82, %84 : vector<24x128xf32>
    %87 = math.absf %86 : vector<24x128xf32>
    %cst_52 = arith.constant 0.000000e+00 : f32
    %88 = vector.broadcast %cst_52 : f32 to vector<24x128xf32>
    %89 = arith.subf %88, %87 : vector<24x128xf32>
    %90 = math.exp %89 : vector<24x128xf32>
    %cst_53 = arith.constant 1.000000e+00 : f32
    %91 = vector.broadcast %cst_53 : f32 to vector<24x128xf32>
    %92 = arith.addf %91, %90 : vector<24x128xf32>
    %93 = math.log %92 : vector<24x128xf32>
    %94 = arith.addf %85, %93 : vector<24x128xf32>
    %95 = arith.select %10, %84, %82 : vector<24x128xi1>, vector<24x128xf32>
    %96 = arith.subf %94, %95 : vector<24x128xf32>
    %cst_54 = arith.constant 0.000000e+00 : f32
    %97 = vector.broadcast %cst_54 : f32 to vector<24x128xf32>
    %98 = arith.select %6, %96, %97 : vector<24x128xi1>, vector<24x128xf32>
    %cst_55 = arith.constant 0.000000e+00 : f32
    %99 = vector.broadcast %cst_55 : f32 to vector<24x128xf32>
    %100 = arith.select %10, %99, %98 : vector<24x128xi1>, vector<24x128xf32>
    %101 = tpu.bitcast %100 : vector<24x128xf32> -> vector<24x128xi32>
    %cst_56 = arith.constant 3.000000e+00 : f32
    %102 = arith.mulf %cst_56, %16 : f32
    %cst_57 = arith.constant 2.999000e+03 : f32
    %103 = arith.minimumf %102, %cst_57 : f32
    %c0_i32_58 = arith.constant 0 : i32
    %c2139095040_i32 = arith.constant 2139095040 : i32
    %c0_i32_59 = arith.constant 0 : i32
    %c32_i32 = arith.constant 32 : i32
    %104 = arith.addi %c0_i32_59, %c32_i32 : i32
    %c1_i32 = arith.constant 1 : i32
    %105:2 = scf.for %arg6 = %c0_i32_59 to %104 step %c1_i32 iter_args(%arg7 = %c0_i32_58, %arg8 = %c2139095040_i32) -> (i32, i32)  : i32 {
      %140 = arith.subi %arg8, %arg7 : i32
      %c1_i32_69 = arith.constant 1 : i32
      %141 = arith.addi %140, %c1_i32_69 : i32
      %c1_i32_70 = arith.constant 1 : i32
      %142 = arith.shrsi %141, %c1_i32_70 : i32
      %143 = arith.addi %arg7, %142 : i32
      %144 = vector.broadcast %143 : i32 to vector<24x128xi32>
      %145 = arith.cmpi sge, %101, %144 : vector<24x128xi32>
      %146 = arith.extui %145 : vector<24x128xi1> to vector<24x128xi32>
      %147 = arith.sitofp %146 : vector<24x128xi32> to vector<24x128xf32>
      %148 = vector.shape_cast %147 : vector<24x128xf32> to vector<1x24x128xf32>
      %cst_71 = arith.constant dense<0.000000e+00> : vector<1xf32>
      %149 = vector.multi_reduction <add>, %148, %cst_71 [1, 2] : vector<1x24x128xf32> to vector<1xf32>
      %150 = vector.shape_cast %149 : vector<1xf32> to vector<1x1x1xf32>
      %151 = vector.extract %150[0, 0, 0] : f32 from vector<1x1x1xf32>
      %152 = arith.cmpf oge, %151, %103 : f32
      %153 = arith.select %152, %143, %arg7 : i32
      %c1_i32_72 = arith.constant 1 : i32
      %154 = arith.subi %143, %c1_i32_72 : i32
      %155 = arith.select %152, %arg8, %154 : i32
      scf.yield %153, %155 : i32, i32
    }
    %106 = vector.broadcast %105#0 : i32 to vector<24x128xi32>
    %107 = arith.cmpi sge, %101, %106 : vector<24x128xi32>
    %cst_60 = arith.constant 1.000000e+00 : f32
    %108 = arith.cmpf oge, %103, %cst_60 : f32
    %109 = vector.broadcast %108 : i1 to vector<24x128xi1>
    %110 = arith.andi %107, %109 : vector<24x128xi1>
    %111 = arith.ori %10, %110 : vector<24x128xi1>
    %112 = arith.extui %111 : vector<24x128xi1> to vector<24x128xi32>
    %113 = arith.sitofp %112 : vector<24x128xi32> to vector<24x128xf32>
    %114 = arith.mulf %98, %113 : vector<24x128xf32>
    %115 = vector.shape_cast %114 : vector<24x128xf32> to vector<1x24x128xf32>
    %cst_61 = arith.constant dense<0.000000e+00> : vector<1xf32>
    %116 = vector.multi_reduction <add>, %115, %cst_61 [1, 2] : vector<1x24x128xf32> to vector<1xf32>
    %117 = vector.shape_cast %116 : vector<1xf32> to vector<1x1x1xf32>
    %118 = vector.extract %117[0, 0, 0] : f32 from vector<1x1x1xf32>
    %119 = tpu.iota {dimensions = array<i32: 0>} : vector<8x128xi32>
    %120 = tpu.iota {dimensions = array<i32: 1>} : vector<8x128xi32>
    %c128_i32_62 = arith.constant 128 : i32
    %121 = vector.broadcast %c128_i32_62 : i32 to vector<8x128xi32>
    %122 = arith.muli %119, %121 : vector<8x128xi32>
    %123 = arith.addi %122, %120 : vector<8x128xi32>
    %c0_i32_63 = arith.constant 0 : i32
    %124 = vector.broadcast %c0_i32_63 : i32 to vector<8x128xi32>
    %125 = arith.cmpi eq, %123, %124 : vector<8x128xi32>
    %c1_i32_64 = arith.constant 1 : i32
    %126 = vector.broadcast %c1_i32_64 : i32 to vector<8x128xi32>
    %127 = arith.cmpi eq, %123, %126 : vector<8x128xi32>
    %c2_i32 = arith.constant 2 : i32
    %128 = vector.broadcast %c2_i32 : i32 to vector<8x128xi32>
    %129 = arith.cmpi eq, %123, %128 : vector<8x128xi32>
    %cst_65 = arith.constant 0.000000e+00 : f32
    %130 = vector.broadcast %16 : f32 to vector<8x128xf32>
    %131 = vector.broadcast %cst_65 : f32 to vector<8x128xf32>
    %132 = arith.select %129, %130, %131 : vector<8x128xi1>, vector<8x128xf32>
    %133 = vector.broadcast %118 : f32 to vector<8x128xf32>
    %134 = arith.select %127, %133, %132 : vector<8x128xi1>, vector<8x128xf32>
    %135 = vector.broadcast %80 : f32 to vector<8x128xf32>
    %136 = arith.select %125, %135, %134 : vector<8x128xi1>, vector<8x128xf32>
    %c0_66 = arith.constant 0 : index
    %c0_67 = arith.constant 0 : index
    %c0_68 = arith.constant 0 : index
    %137 = vector.load %arg5[%c0_66, %c0_67, %c0_68] : memref<1x8x128xf32, #tpu.memory_space<vmem>>, vector<1x8x128xf32>
    %138 = vector.shape_cast %137 : vector<1x8x128xf32> to vector<8x128xf32>
    %139 = vector.shape_cast %136 : vector<8x128xf32> to vector<1x8x128xf32>
    tpu.vector_store %arg5[%c0_66, %c0_67, %c0_68], %139 {strides = array<i32>} : memref<1x8x128xf32, #tpu.memory_space<vmem>>, vector<1x8x128xf32>,
    return
  }
  func.func @transform_0(%arg0: i32) -> (i32, i32, i32, i32) {
    %c0_i32 = arith.constant 0 : i32
    %c0_i32_0 = arith.constant 0 : i32
    %c0_i32_1 = arith.constant 0 : i32
    %c0_i32_2 = arith.constant 0 : i32
    return %c0_i32, %arg0, %c0_i32_0, %c0_i32_1 : i32, i32, i32, i32
  }
  func.func @transform_1(%arg0: i32) -> (i32, i32, i32, i32) {
    %c0_i32 = arith.constant 0 : i32
    %c0_i32_0 = arith.constant 0 : i32
    %c0_i32_1 = arith.constant 0 : i32
    %c0_i32_2 = arith.constant 0 : i32
    return %c0_i32, %arg0, %c0_i32_0, %c0_i32_1 : i32, i32, i32, i32
  }
  func.func @transform_2(%arg0: i32) -> (i32, i32, i32, i32) {
    %c0_i32 = arith.constant 0 : i32
    %c0_i32_0 = arith.constant 0 : i32
    %c0_i32_1 = arith.constant 0 : i32
    %c0_i32_2 = arith.constant 0 : i32
    return %c0_i32, %arg0, %c0_i32_0, %c0_i32_1 : i32, i32, i32, i32
  }
  func.func @transform_3(%arg0: i32) -> (i32, i32, i32) {
    %c0_i32 = arith.constant 0 : i32
    %c0_i32_0 = arith.constant 0 : i32
    %c0_i32_1 = arith.constant 0 : i32
    return %arg0, %c0_i32, %c0_i32_0 : i32, i32, i32
  }
  func.func @transform_4(%arg0: i32) -> (i32, i32, i32) {
    %c0_i32 = arith.constant 0 : i32
    %c0_i32_0 = arith.constant 0 : i32
    %c0_i32_1 = arith.constant 0 : i32
    return %arg0, %c0_i32, %c0_i32_0 : i32, i32, i32
  }
}

</mosaic_0001>

<llo_original>
// kernel: tpu_custom_call.1
$region0: #{tpu_custom_call.1}
  #allocation0 [shape = 'u32[]', space=smem, size = 0x4, offset = 0x4, fixed_abs, tag = 'smem constant byte address 0x4 - core index']
  #allocation1 [shape = 'u32[72,128]{1,0:T(1,128)}', space=vmem, size = 0x9000, scoped, tag = 'internal scratch']
  #allocation11 [shape = 's32[]', space=sflag, size = 0x4, offset = 0, fixed_abs, tag = 'sflag constant byte address 0x0 - dummy sync flag']
  #allocation13 [shape = 's32[]', space=sflag, size = 0x4, offset = 0, fixed_abs, tag = 'sflag constant byte address 0x0 - dummy sync flag']
  #allocation15 [shape = 's32[]', space=sflag, size = 0x4, offset = 0, fixed_abs, tag = 'sflag constant byte address 0x0 - dummy sync flag']
  %s0 = inlined_call_operand.hbm [shape: f32[4,2,24,128], index: 0, kind: input, shape index: {}]
  %s1 = inlined_call_operand.hbm [shape: f32[4,2,24,128], index: 1, kind: input, shape index: {}]
  %s2 = inlined_call_operand.hbm [shape: f32[2,2,24,128], index: 2, kind: input, shape index: {}]
  %s3 = inlined_call_operand.hbm [shape: s32[2,24,128], index: 3, kind: input, shape index: {}]
  %s4 = inlined_call_operand.hbm [shape: f32[2,8,128], index: 4, kind: output, shape index: {}]
  %s5 = sld [smem:[#allocation0]]
  $region72: #{tpu_custom_call.1} parent=0
    _
  %s7 = ssub.s32 1, %s5
  %s8 = scalar_select 0, %s7, %s5
  $region1: #{tpu_custom_call.1} parent=0
    #allocation2 [shape = 'u8[98304]{0}', space=vmem, size = 0x18000, scoped, tag = 'input window, operand 0']
    #allocation3 [shape = 's32[2]{0}', space=sflag, size = 0x8, scoped, tag = 'scoped memory for tpu_custom_call.1']
    #allocation4 [shape = 's32[2]{0}', space=sflag, size = 0x8, scoped, tag = 'scoped memory for tpu_custom_call.1']
    #allocation5 [shape = 'u8[98304]{0}', space=vmem, size = 0x18000, scoped, tag = 'input window, operand 1']
    #allocation6 [shape = 's32[2]{0}', space=sflag, size = 0x8, scoped, tag = 'scoped memory for tpu_custom_call.1']
    #allocation7 [shape = 'u8[49152]{0}', space=vmem, size = 0xc000, scoped, tag = 'input window, operand 2']
    #allocation8 [shape = 'u8[24576]{0}', space=vmem, size = 0x6000, scoped, tag = 'input window, operand 3']
    #allocation9 [shape = 's32[2]{0}', space=sflag, size = 0x8, scoped, tag = 'scoped memory for tpu_custom_call.1']
    #allocation10 [shape = 'u8[8192]{0}', space=vmem, size = 0x2000, scoped, tag = 'output window, operand 0']
    %9 = vsyncpa [#allocation3], 0
    %s10 = scalar_lea.sflag [#allocation3], 1
    %11 = vsyncpa %s10, 0
    %12 = vsyncpa [#allocation6], 0
    %s13 = scalar_lea.sflag [#allocation6], 1
    %14 = vsyncpa %s13, 0
    %15 = vsyncpa [#allocation9], 0
    %s16 = scalar_lea.sflag [#allocation9], 1
    %17 = vsyncpa %s16, 0
    %18 = vsyncpa [#allocation4], 0
    %s19 = scalar_lea.sflag [#allocation4], 1
    %20 = vsyncpa %s19, 0
    loop: start=0, step=1, limit=4
    $region2: #{tpu_custom_call.1} parent=1 // loop_pre_header
      _
    $region3: #{tpu_custom_call.1} parent=1 // loop_header
      %s22 = sphi 0, %s26
      %p23 = scmp.ge.s32.totalorder %s22, 4
      %s32 = sphi 0, %s34
      %s35 = sphi 0, %s32
      %s36 = sphi 0, %s35
      %s52 = sphi 0, %s36
      %s58 = sphi 0, %s60
      %s61 = sphi 0, %s58
      %s62 = sphi 0, %s61
      %s78 = sphi 0, %s62
      %s84 = sphi 0, %s86
      %s87 = sphi 0, %s84
      %s88 = sphi 0, %s87
      %s104 = sphi 0, %s88
      %s110 = sphi 0, %s112
      %s113 = sphi 0, %s110
      %s114 = sphi 0, %s113
      %s130 = sphi 0, %s114
      %s136 = sphi 0, %s138
      %s139 = sphi 0, %s136
      %s140 = sphi 0, %s139
      %s156 = sphi 0, %s140
    $region4: #{tpu_custom_call.1} parent=1 // loop_header_branch
      %25 = sbr.rel (%p23) target = $region8
    $region5: #{tpu_custom_call.1} parent=1 // loop_body
      %s27 = ssub.s32 %s22, 1
      %s28 = ssub.s32 %s22, 2
      %s29 = sadd.s32 %s22, 1
      %s30 = ssub.s32 %s22, %s29
      %p31 = scmp.eq.s32.totalorder %s30, 0
      %s33 = sadd.s32 %s32, 1
      %s34 = scalar_select %p31, %s32, %s33
      %p37 = pneg %p31
      %p38 = scmp.eq.s32.totalorder %s22, 1
      %p39 = por %p37, %p38
      %p40 = scmp.ne.s32.totalorder %s32, %s35
      %p41 = scmp.eq.s32.totalorder %s22, 0
      %p42 = por %p40, %p41
      %p43 = scmp.ne.s32.totalorder %s32, %s35
      %p44 = scmp.eq.s32.totalorder %s27, 1
      %p45 = por %p43, %p44
      %p46 = scmp.ne.s32.totalorder %s35, %s36
      %p47 = scmp.eq.s32.totalorder %s27, 0
      %p48 = por %p46, %p47
      %p49 = scmp.ne.s32.totalorder %s35, %s36
      %p50 = scmp.eq.s32.totalorder %s28, 1
      %p51 = por %p49, %p50
      %p53 = scmp.ne.s32.totalorder %s36, %s52
      %p54 = scmp.eq.s32.totalorder %s28, 0
      %p55 = por %p53, %p54
      %s56 = ssub.s32 %s22, %s29
      %p57 = scmp.eq.s32.totalorder %s56, 0
      %s59 = sadd.s32 %s58, 1
      %s60 = scalar_select %p57, %s58, %s59
      %p63 = pneg %p57
      %p64 = scmp.eq.s32.totalorder %s22, 1
      %p65 = por %p63, %p64
      %p66 = scmp.ne.s32.totalorder %s58, %s61
      %p67 = scmp.eq.s32.totalorder %s22, 0
      %p68 = por %p66, %p67
      %p69 = scmp.ne.s32.totalorder %s58, %s61
      %p70 = scmp.eq.s32.totalorder %s27, 1
      %p71 = por %p69, %p70
      %p72 = scmp.ne.s32.totalorder %s61, %s62
      %p73 = scmp.eq.s32.totalorder %s27, 0
      %p74 = por %p72, %p73
      %p75 = scmp.ne.s32.totalorder %s61, %s62
      %p76 = scmp.eq.s32.totalorder %s28, 1
      %p77 = por %p75, %p76
      %p79 = scmp.ne.s32.totalorder %s62, %s78
      %p80 = scmp.eq.s32.totalorder %s28, 0
      %p81 = por %p79, %p80
      %s82 = ssub.s32 %s22, %s29
      %p83 = scmp.eq.s32.totalorder %s82, 0
      %s85 = sadd.s32 %s84, 1
      %s86 = scalar_select %p83, %s84, %s85
      %p89 = pneg %p83
      %p90 = scmp.eq.s32.totalorder %s22, 1
      %p91 = por %p89, %p90
      %p92 = scmp.ne.s32.totalorder %s84, %s87
      %p93 = scmp.eq.s32.totalorder %s22, 0
      %p94 = por %p92, %p93
      %p95 = scmp.ne.s32.totalorder %s84, %s87
      %p96 = scmp.eq.s32.totalorder %s27, 1
      %p97 = por %p95, %p96
      %p98 = scmp.ne.s32.totalorder %s87, %s88
      %p99 = scmp.eq.s32.totalorder %s27, 0
      %p100 = por %p98, %p99
      %p101 = scmp.ne.s32.totalorder %s87, %s88
      %p102 = scmp.eq.s32.totalorder %s28, 1
      %p103 = por %p101, %p102
      %p105 = scmp.ne.s32.totalorder %s88, %s104
      %p106 = scmp.eq.s32.totalorder %s28, 0
      %p107 = por %p105, %p106
      %s108 = ssub.s32 %s22, %s29
      %p109 = scmp.eq.s32.totalorder %s108, 0
      %s111 = sadd.s32 %s110, 1
      %s112 = scalar_select %p109, %s110, %s111
      %p115 = pneg %p109
      %p116 = scmp.eq.s32.totalorder %s22, 1
      %p117 = por %p115, %p116
      %p118 = scmp.ne.s32.totalorder %s110, %s113
      %p119 = scmp.eq.s32.totalorder %s22, 0
      %p120 = por %p118, %p119
      %p121 = scmp.ne.s32.totalorder %s110, %s113
      %p122 = scmp.eq.s32.totalorder %s27, 1
      %p123 = por %p121, %p122
      %p124 = scmp.ne.s32.totalorder %s113, %s114
      %p125 = scmp.eq.s32.totalorder %s27, 0
      %p126 = por %p124, %p125
      %p127 = scmp.ne.s32.totalorder %s113, %s114
      %p128 = scmp.eq.s32.totalorder %s28, 1
      %p129 = por %p127, %p128
      %p131 = scmp.ne.s32.totalorder %s114, %s130
      %p132 = scmp.eq.s32.totalorder %s28, 0
      %p133 = por %p131, %p132
      %s134 = ssub.s32 %s22, %s29
      %p135 = scmp.eq.s32.totalorder %s134, 0
      %s137 = sadd.s32 %s136, 1
      %s138 = scalar_select %p135, %s136, %s137
      %p141 = pneg %p135
      %p142 = scmp.eq.s32.totalorder %s22, 1
      %p143 = por %p141, %p142
      %p144 = scmp.ne.s32.totalorder %s136, %s139
      %p145 = scmp.eq.s32.totalorder %s22, 0
      %p146 = por %p144, %p145
      %p147 = scmp.ne.s32.totalorder %s136, %s139
      %p148 = scmp.eq.s32.totalorder %s27, 1
      %p149 = por %p147, %p148
      %p150 = scmp.ne.s32.totalorder %s139, %s140
      %p151 = scmp.eq.s32.totalorder %s27, 0
      %p152 = por %p150, %p151
      %p153 = scmp.ne.s32.totalorder %s139, %s140
      %p154 = scmp.eq.s32.totalorder %s28, 1
      %p155 = por %p153, %p154
      %p157 = scmp.ne.s32.totalorder %s140, %s156
      %p158 = scmp.eq.s32.totalorder %s28, 0
      %p159 = por %p157, %p158
      %p160 = scmp.le.s32.totalorder 1, %s22
      %p161 = scmp.lt.s32.totalorder %s22, 3
      %p162 = pnand %p160, %p161
      %p163 = pneg %p162
      // Predicated region
      $region9: #{tpu_custom_call.1} parent=5 // pred_check
        _
      $region10: #{tpu_custom_call.1} parent=5 // pred_check_branch
        %165 = sbr.rel (%p162) target = $region12
      $region11: #{tpu_custom_call.1} parent=5 // pred_region
        %s166 = ssub.s32 %s22, 1
      $region12: #{tpu_custom_call.1} parent=5 // pred_fallthru
        _
      %p167 = scmp.lt.s32.totalorder %s22, 2
      // Predicated region
      $region13: #{tpu_custom_call.1} parent=5 // pred_check
        %p168 = pneg %p167
      $region14: #{tpu_custom_call.1} parent=5 // pred_check_branch
        %170 = sbr.rel (%p168) target = $region16
      $region15: #{tpu_custom_call.1} parent=5 // pred_region
        // Predicated region
        $region17: #{tpu_custom_call.1} parent=15 // pred_check
          %p171 = pneg %p42
        $region18: #{tpu_custom_call.1} parent=15 // pred_check_branch
          %173 = sbr.rel (%p171) target = $region20
        $region19: #{tpu_custom_call.1} parent=15 // pred_region
          #allocation12 [shape = 'u32[6]{0}', space=smem, size = 0x18, scoped, tag = 'DMA stride descriptor']
          %s174 = sand.u32 %s32, 1
          %s175 = scalar_lea.sflag [#allocation3], %s174
          %s176 = sand.u32 %s32, 1
          %s177 = smul.addr %s176, 96
          %s178 = scalar_lea.vmem [#allocation2], %s177
          %180 = vsyncadd %s175, 0
          %s181 = smul.addr %s22, 3
          %s182 = smul.addr %s181, 8
          %s183 = scalar_lea.hbm %s0, %s182
          %s185 = sshll.u32 1, 14
          %s186 = sxor.u32 4294967295, %s185
          %s188 = sld [smem:[#allocation0]]
          %s189 = sadd.s32 2, %s188
          %s191 = sshll.u32 7, 26
          %s192 = sxor.u32 4294967295, %s191
          %s193 = sand.u32 0, %s192
          %s194 = sshll.u32 %s189, 26
          %s195 = sor.u32 %s193, %s194
          %s196 = sshll.u32 %s183, 4
          %s197 = int_to_ptr.hbm [resolvable:$true] %s196
          %s198 = sshll.u32 %s178, 4
          %s199 = int_to_ptr.vmem [resolvable:$true] %s198
          %205 = sst [smem:[#allocation12]] 768
          %s206 = scalar_lea.smem [#allocation12], 1
          %207 = sst [smem:[%s206]] 384
          %s208 = scalar_lea.smem [#allocation12], 2
          %209 = sst [smem:[%s208]] 3
          %s210 = scalar_lea.smem [#allocation12], 3
          %211 = sst [smem:[%s210]] 128
          %s212 = scalar_lea.smem [#allocation12], 4
          %213 = sst [smem:[%s212]] 128
          %s214 = scalar_lea.smem [#allocation12], 5
          %215 = sst [smem:[%s214]] 8
          %217 = dma.general %s197, 1536, %s199, %s175, [#allocation11], [#allocation12], %s195, 0
        $region20: #{tpu_custom_call.1} parent=15 // pred_fallthru
          _
        // Predicated region
        $region21: #{tpu_custom_call.1} parent=15 // pred_check
          %p218 = pneg %p68
        $region22: #{tpu_custom_call.1} parent=15 // pred_check_branch
          %220 = sbr.rel (%p218) target = $region24
        $region23: #{tpu_custom_call.1} parent=15 // pred_region
          #allocation14 [shape = 'u32[6]{0}', space=smem, size = 0x18, scoped, tag = 'DMA stride descriptor']
          %s221 = sand.u32 %s22, 1
          %s222 = scalar_lea.sflag [#allocation6], %s221
          %s223 = sand.u32 %s58, 1
          %s224 = smul.addr %s223, 96
          %s225 = scalar_lea.vmem [#allocation5], %s224
          %227 = vsyncadd %s222, 0
          %s228 = smul.addr %s22, 3
          %s229 = smul.addr %s228, 8
          %s230 = scalar_lea.hbm %s1, %s229
          %s232 = sshll.u32 1, 14
          %s233 = sxor.u32 4294967295, %s232
          %s235 = sld [smem:[#allocation0]]
          %s236 = sadd.s32 2, %s235
          %s238 = sshll.u32 7, 26
          %s239 = sxor.u32 4294967295, %s238
          %s240 = sand.u32 0, %s239
          %s241 = sshll.u32 %s236, 26
          %s242 = sor.u32 %s240, %s241
          %s243 = sshll.u32 %s230, 4
          %s244 = int_to_ptr.hbm [resolvable:$true] %s243
          %s245 = sshll.u32 %s225, 4
          %s246 = int_to_ptr.vmem [resolvable:$true] %s245
          %252 = sst [smem:[#allocation14]] 768
          %s253 = scalar_lea.smem [#allocation14], 1
          %254 = sst [smem:[%s253]] 384
          %s255 = scalar_lea.smem [#allocation14], 2
          %256 = sst [smem:[%s255]] 3
          %s257 = scalar_lea.smem [#allocation14], 3
          %258 = sst [smem:[%s257]] 128
          %s259 = scalar_lea.smem [#allocation14], 4
          %260 = sst [smem:[%s259]] 128
          %s261 = scalar_lea.smem [#allocation14], 5
          %262 = sst [smem:[%s261]] 8
          %264 = dma.general %s244, 1536, %s246, %s222, [#allocation13], [#allocation14], %s242, 0
        $region24: #{tpu_custom_call.1} parent=15 // pred_fallthru
          _
        // Predicated region
        $region25: #{tpu_custom_call.1} parent=15 // pred_check
          %p265 = pneg %p94
        $region26: #{tpu_custom_call.1} parent=15 // pred_check_branch
          %267 = sbr.rel (%p265) target = $region28
        $region27: #{tpu_custom_call.1} parent=15 // pred_region
          #allocation16 [shape = 'u32[6]{0}', space=smem, size = 0x18, scoped, tag = 'DMA stride descriptor']
          %s268 = sand.u32 %s22, 1
          %s269 = scalar_lea.sflag [#allocation6], %s268
          %s270 = sand.u32 %s84, 1
          %s271 = smul.addr %s270, 48
          %s272 = scalar_lea.vmem [#allocation7], %s271
          %274 = vsyncadd %s269, 0
          %s275 = smul.addr %s22, 3
          %s276 = smul.addr %s275, 8
          %s277 = scalar_lea.hbm %s2, %s276
          %s279 = sshll.u32 1, 14
          %s280 = sxor.u32 4294967295, %s279
          %s282 = sld [smem:[#allocation0]]
          %s283 = sadd.s32 2, %s282
          %s285 = sshll.u32 7, 26
          %s286 = sxor.u32 4294967295, %s285
          %s287 = sand.u32 0, %s286
          %s288 = sshll.u32 %s283, 26
          %s289 = sor.u32 %s287, %s288
          %s290 = sshll.u32 %s277, 4
          %s291 = int_to_ptr.hbm [resolvable:$true] %s290
          %s292 = sshll.u32 %s272, 4
          %s293 = int_to_ptr.vmem [resolvable:$true] %s292
          %299 = sst [smem:[#allocation16]] 768
          %s300 = scalar_lea.smem [#allocation16], 1
          %301 = sst [smem:[%s300]] 384
          %s302 = scalar_lea.smem [#allocation16], 2
          %303 = sst [smem:[%s302]] 3
          %s304 = scalar_lea.smem [#allocation16], 3
          %305 = sst [smem:[%s304]] 128
          %s306 = scalar_lea.smem [#allocation16], 4
          %307 = sst [smem:[%s306]] 128
          %s308 = scalar_lea.smem [#allocation16], 5
          %309 = sst [smem:[%s308]] 8
          %311 = dma.general %s291, 768, %s293, %s269, [#allocation15], [#allocation16], %s289, 0
        $region28: #{tpu_custom_call.1} parent=15 // pred_fallthru
          _
        // Predicated region
        $region29: #{tpu_custom_call.1} parent=15 // pred_check
          %p312 = pneg %p120
        $region30: #{tpu_custom_call.1} parent=15 // pred_check_branch
          %314 = sbr.rel (%p312) target = $region32
        $region31: #{tpu_custom_call.1} parent=15 // pred_region
          %s315 = sand.u32 %s110, 1
          %s316 = scalar_lea.sflag [#allocation9], %s315
          %s317 = sand.u32 %s110, 1
          %s318 = smul.addr %s317, 24
          %s319 = scalar_lea.vmem [#allocation8], %s318
          %321 = vsyncadd %s316, 0
          %s322 = smul.addr %s22, 3
          %s323 = smul.addr %s322, 8
          %s324 = scalar_lea.hbm %s3, %s323
          %s325 = sshll.u32 %s324, 4
          %s326 = int_to_ptr.hbm [resolvable:$true] %s325
          %s327 = sshll.u32 %s319, 4
          %s328 = int_to_ptr.vmem [resolvable:$true] %s327
          %333 = dma.hbm_to_vmem [thread:$0]  %s326, 384, %s328, %s316, 128, 128, 8
        $region32: #{tpu_custom_call.1} parent=15 // pred_fallthru
          _
      $region16: #{tpu_custom_call.1} parent=5 // pred_fallthru
        _
      %p334 = scmp.le.s32.totalorder 1, %s22
      %p335 = scmp.lt.s32.totalorder %s22, 3
      %p336 = pnand %p334, %p335
      %p337 = pneg %p336
      // Predicated region
      $region33: #{tpu_custom_call.1} parent=5 // pred_check
        _
      $region34: #{tpu_custom_call.1} parent=5 // pred_check_branch
        %339 = sbr.rel (%p336) target = $region36
      $region35: #{tpu_custom_call.1} parent=5 // pred_region
        %s340 = ssub.s32 %s22, 1
        %s341 = sand.u32 %s35, 1
        %s342 = scalar_lea.sflag [#allocation3], %s341
        %s343 = sand.u32 %s35, 1
        %s344 = smul.addr %s343, 96
        %s345 = scalar_lea.vmem [#allocation2], %s344
        // Predicated region
        $region37: #{tpu_custom_call.1} parent=35 // pred_check
          %p346 = pneg %p48
        $region38: #{tpu_custom_call.1} parent=35 // pred_check_branch
          %348 = sbr.rel (%p346) target = $region40
        $region39: #{tpu_custom_call.1} parent=35 // pred_region
          %350 = dma.done %s342, 1536
        $region40: #{tpu_custom_call.1} parent=35 // pred_fallthru
          _
        %s351 = sand.u32 %s27, 1
        %s352 = scalar_lea.sflag [#allocation6], %s351
        %s353 = sand.u32 %s61, 1
        %s354 = smul.addr %s353, 96
        %s355 = scalar_lea.vmem [#allocation5], %s354
        // Predicated region
        $region41: #{tpu_custom_call.1} parent=35 // pred_check
          %p356 = pneg %p74
        $region42: #{tpu_custom_call.1} parent=35 // pred_check_branch
          %358 = sbr.rel (%p356) target = $region44
        $region43: #{tpu_custom_call.1} parent=35 // pred_region
          %360 = dma.done %s352, 1536
        $region44: #{tpu_custom_call.1} parent=35 // pred_fallthru
          _
        %s361 = sand.u32 %s27, 1
        %s362 = scalar_lea.sflag [#allocation6], %s361
        %s363 = sand.u32 %s87, 1
        %s364 = smul.addr %s363, 48
        %s365 = scalar_lea.vmem [#allocation7], %s364
        // Predicated region
        $region45: #{tpu_custom_call.1} parent=35 // pred_check
          %p366 = pneg %p100
        $region46: #{tpu_custom_call.1} parent=35 // pred_check_branch
          %368 = sbr.rel (%p366) target = $region48
        $region47: #{tpu_custom_call.1} parent=35 // pred_region
          %370 = dma.done %s362, 768
        $region48: #{tpu_custom_call.1} parent=35 // pred_fallthru
          _
        %s371 = sand.u32 %s113, 1
        %s372 = scalar_lea.sflag [#allocation9], %s371
        %s373 = sand.u32 %s113, 1
        %s374 = smul.addr %s373, 24
        %s375 = scalar_lea.vmem [#allocation8], %s374
        // Predicated region
        $region49: #{tpu_custom_call.1} parent=35 // pred_check
          %p376 = pneg %p126
        $region50: #{tpu_custom_call.1} parent=35 // pred_check_branch
          %378 = sbr.rel (%p376) target = $region52
        $region51: #{tpu_custom_call.1} parent=35 // pred_region
          %380 = dma.done %s372, 384
        $region52: #{tpu_custom_call.1} parent=35 // pred_fallthru
          _
        %s381 = sand.u32 %s35, 1
        %s382 = scalar_lea.sflag [#allocation3], %s381
        %s383 = sand.u32 %s35, 1
        %s384 = smul.addr %s383, 96
        %s385 = scalar_lea.vmem [#allocation2], %s384
        %p386 = pneg %p48
        %p387 = pneg %p45
        %s388 = sand.u32 %s27, 1
        %s389 = scalar_lea.sflag [#allocation6], %s388
        %s390 = sand.u32 %s61, 1
        %s391 = smul.addr %s390, 96
        %s392 = scalar_lea.vmem [#allocation5], %s391
        %p393 = pneg %p74
        %p394 = pneg %p71
        %s395 = sand.u32 %s27, 1
        %s396 = scalar_lea.sflag [#allocation6], %s395
        %s397 = sand.u32 %s87, 1
        %s398 = smul.addr %s397, 48
        %s399 = scalar_lea.vmem [#allocation7], %s398
        %p400 = pneg %p100
        %p401 = pneg %p97
        %s402 = sand.u32 %s113, 1
        %s403 = scalar_lea.sflag [#allocation9], %s402
        %s404 = sand.u32 %s113, 1
        %s405 = smul.addr %s404, 24
        %s406 = scalar_lea.vmem [#allocation8], %s405
        %p407 = pneg %p126
        %p408 = pneg %p123
        %p409 = pneg %p152
        %p410 = pneg %p149
        %s411 = sand.u32 %s139, 1
        %s412 = scalar_lea.sflag [#allocation4], %s411
        %s413 = sand.u32 %s139, 1
        %s414 = smul.addr %s413, 8
        %s415 = scalar_lea.vmem [#allocation10], %s414
        %v416 = vlaneseq
        %v417 = vshrl.u32 %v416, 7
        %v418 = vadd.s32 %v417, 8
        %v419 = vadd.s32 %v417, 16
        %v420 = vlaneseq
        %v421 = vand.u32 %v420, 127
        %v422 = vmul.u32 %v417, 128
        %v423 = vmul.u32 %v418, 128
        %v424 = vmul.u32 %v419, 128
        %v425 = vadd.s32 %v422, %v421
        %v426 = vadd.s32 %v423, %v421
        %v427 = vadd.s32 %v424, %v421
        %vm428 = vcmp.lt.s32.totalorder %v425, 3000
        %vm429 = vcmp.lt.s32.totalorder %v426, 3000
        %vm430 = vcmp.lt.s32.totalorder %v427, 3000
        %v431 = vld [vmem:[%s375] sm:$0xff]
        %v432 = vld [vmem:[%s375 + $0x8] sm:$0xff]
        %v433 = vld [vmem:[%s375 + $0x10] sm:$0xff]
        %vm434 = vcmp.gt.s32.totalorder %v431, 0
        %vm435 = vcmp.gt.s32.totalorder %v432, 0
        %vm436 = vcmp.gt.s32.totalorder %v433, 0
        %v437 = vsel %vm434, 1, 0
        %v438 = vsel %vm435, 1, 0
        %v439 = vsel %vm436, 1, 0
        %v440 = vcvt.s32.f32 %v437
        %v441 = vcvt.s32.f32 %v438
        %v442 = vcvt.s32.f32 %v439
        %v443 = vadd.f32 %v440, %v441
        %v444 = vadd.f32 %v443, %v442
        %445 = vadd.xlane.f32.xlu0 %v444
        %v446 = vpop.xlane.xlu0 %445
        %v447 = vrot.slane %v446, 4
        %v448 = vadd.f32 %v446, %v447
        %v449 = vrot.slane %v448, 2
        %v450 = vadd.f32 %v448, %v449
        %v451 = vrot.slane %v450, 1
        %v452 = vadd.f32 %v450, %v451
        %s453 = vtos %v452
        %v454 = vld [vmem:[%s345] sm:$0xff]
        %v455 = vld [vmem:[%s345 + $0x8] sm:$0xff]
        %v456 = vld [vmem:[%s345 + $0x10] sm:$0xff]
        %v457 = vld [vmem:[%s355] sm:$0xff]
        %v458 = vld [vmem:[%s355 + $0x8] sm:$0xff]
        %v459 = vld [vmem:[%s355 + $0x10] sm:$0xff]
        %v460 = vsub.f32 %v454, %v457
        %v461 = vsub.f32 %v455, %v458
        %v462 = vsub.f32 %v456, %v459
        %v463 = vand.u32 2147483647, %v460
        %v464 = vand.u32 2147483647, %v461
        %v465 = vand.u32 2147483647, %v462
        %vm466 = vcmp.lt.f32.partialorder %v463, 1.0
        %vm467 = vcmp.lt.f32.partialorder %v464, 1.0
        %vm468 = vcmp.lt.f32.partialorder %v465, 1.0
        %v469 = vmul.f32 %v460, 0.5
        %v470 = vmul.f32 %v461, 0.5
        %v471 = vmul.f32 %v462, 0.5
        %v472 = vmul.f32 %v469, %v460
        %v473 = vmul.f32 %v470, %v461
        %v474 = vmul.f32 %v471, %v462
        %v475 = vsub.f32 %v463, 0.5
        %v476 = vsub.f32 %v464, 0.5
        %v477 = vsub.f32 %v465, 0.5
        %v478 = vsel %vm466, %v472, %v475
        %v479 = vsel %vm467, %v473, %v476
        %v480 = vsel %vm468, %v474, %v477
        %s481 = scalar_lea.vmem %s345, 24 [#allocation2]
        %v482 = vld [vmem:[%s481] sm:$0xff]
        %v483 = vld [vmem:[%s481 + $0x8] sm:$0xff]
        %v484 = vld [vmem:[%s481 + $0x10] sm:$0xff]
        %s485 = scalar_lea.vmem %s355, 24 [#allocation5]
        %v486 = vld [vmem:[%s485] sm:$0xff]
        %v487 = vld [vmem:[%s485 + $0x8] sm:$0xff]
        %v488 = vld [vmem:[%s485 + $0x10] sm:$0xff]
        %v489 = vsub.f32 %v482, %v486
        %v490 = vsub.f32 %v483, %v487
        %v491 = vsub.f32 %v484, %v488
        %v492 = vand.u32 2147483647, %v489
        %v493 = vand.u32 2147483647, %v490
        %v494 = vand.u32 2147483647, %v491
        %vm495 = vcmp.lt.f32.partialorder %v492, 1.0
        %vm496 = vcmp.lt.f32.partialorder %v493, 1.0
        %vm497 = vcmp.lt.f32.partialorder %v494, 1.0
        %v498 = vmul.f32 %v489, 0.5
        %v499 = vmul.f32 %v490, 0.5
        %v500 = vmul.f32 %v491, 0.5
        %v501 = vmul.f32 %v498, %v489
        %v502 = vmul.f32 %v499, %v490
        %v503 = vmul.f32 %v500, %v491
        %v504 = vsub.f32 %v492, 0.5
        %v505 = vsub.f32 %v493, 0.5
        %v506 = vsub.f32 %v494, 0.5
        %v507 = vsel %vm495, %v501, %v504
        %v508 = vsel %vm496, %v502, %v505
        %v509 = vsel %vm497, %v503, %v506
        %v510 = vadd.f32 %v478, %v507
        %v511 = vadd.f32 %v479, %v508
        %v512 = vadd.f32 %v480, %v509
        %s513 = scalar_lea.vmem %s345, 48 [#allocation2]
        %v514 = vld [vmem:[%s513] sm:$0xff]
        %v515 = vld [vmem:[%s513 + $0x8] sm:$0xff]
        %v516 = vld [vmem:[%s513 + $0x10] sm:$0xff]
        %s517 = scalar_lea.vmem %s355, 48 [#allocation5]
        %v518 = vld [vmem:[%s517] sm:$0xff]
        %v519 = vld [vmem:[%s517 + $0x8] sm:$0xff]
        %v520 = vld [vmem:[%s517 + $0x10] sm:$0xff]
        %v521 = vsub.f32 %v514, %v518
        %v522 = vsub.f32 %v515, %v519
        %v523 = vsub.f32 %v516, %v520
        %v524 = vand.u32 2147483647, %v521
        %v525 = vand.u32 2147483647, %v522
        %v526 = vand.u32 2147483647, %v523
        %vm527 = vcmp.lt.f32.partialorder %v524, 1.0
        %vm528 = vcmp.lt.f32.partialorder %v525, 1.0
        %vm529 = vcmp.lt.f32.partialorder %v526, 1.0
        %v530 = vmul.f32 %v521, 0.5
        %v531 = vmul.f32 %v522, 0.5
        %v532 = vmul.f32 %v523, 0.5
        %v533 = vmul.f32 %v530, %v521
        %v534 = vmul.f32 %v531, %v522
        %v535 = vmul.f32 %v532, %v523
        %v536 = vsub.f32 %v524, 0.5
        %v537 = vsub.f32 %v525, 0.5
        %v538 = vsub.f32 %v526, 0.5
        %v539 = vsel %vm527, %v533, %v536
        %v540 = vsel %vm528, %v534, %v537
        %v541 = vsel %vm529, %v535, %v538
        %v542 = vadd.f32 %v510, %v539
        %v543 = vadd.f32 %v511, %v540
        %v544 = vadd.f32 %v512, %v541
        %s545 = scalar_lea.vmem %s345, 72 [#allocation2]
        %v546 = vld [vmem:[%s545] sm:$0xff]
        %v547 = vld [vmem:[%s545 + $0x8] sm:$0xff]
        %v548 = vld [vmem:[%s545 + $0x10] sm:$0xff]
        %s549 = scalar_lea.vmem %s355, 72 [#allocation5]
        %v550 = vld [vmem:[%s549] sm:$0xff]
        %v551 = vld [vmem:[%s549 + $0x8] sm:$0xff]
        %v552 = vld [vmem:[%s549 + $0x10] sm:$0xff]
        %v553 = vsub.f32 %v546, %v550
        %v554 = vsub.f32 %v547, %v551
        %v555 = vsub.f32 %v548, %v552
        %v556 = vand.u32 2147483647, %v553
        %v557 = vand.u32 2147483647, %v554
        %v558 = vand.u32 2147483647, %v555
        %vm559 = vcmp.lt.f32.partialorder %v556, 1.0
        %vm560 = vcmp.lt.f32.partialorder %v557, 1.0
        %vm561 = vcmp.lt.f32.partialorder %v558, 1.0
        %v562 = vmul.f32 %v553, 0.5
        %v563 = vmul.f32 %v554, 0.5
        %v564 = vmul.f32 %v555, 0.5
        %v565 = vmul.f32 %v562, %v553
        %v566 = vmul.f32 %v563, %v554
        %v567 = vmul.f32 %v564, %v555
        %v568 = vsub.f32 %v556, 0.5
        %v569 = vsub.f32 %v557, 0.5
        %v570 = vsub.f32 %v558, 0.5
        %v571 = vsel %vm559, %v565, %v568
        %v572 = vsel %vm560, %v566, %v569
        %v573 = vsel %vm561, %v567, %v570
        %v574 = vadd.f32 %v542, %v571
        %v575 = vadd.f32 %v543, %v572
        %v576 = vadd.f32 %v544, %v573
        %v577 = vmul.f32 %v574, %v440
        %v578 = vmul.f32 %v575, %v441
        %v579 = vmul.f32 %v576, %v442
        %v580 = vadd.f32 %v577, %v578
        %v581 = vadd.f32 %v580, %v579
        %582 = vadd.xlane.f32.xlu0 %v581
        %v583 = vpop.xlane.xlu0 %582
        %v584 = vrot.slane %v583, 4
        %v585 = vadd.f32 %v583, %v584
        %v586 = vrot.slane %v585, 2
        %v587 = vadd.f32 %v585, %v586
        %v588 = vrot.slane %v587, 1
        %v589 = vadd.f32 %v587, %v588
        %s590 = vtos %v589
        %v591 = vld [vmem:[%s365] sm:$0xff]
        %v592 = vld [vmem:[%s365 + $0x8] sm:$0xff]
        %v593 = vld [vmem:[%s365 + $0x10] sm:$0xff]
        %s594 = scalar_lea.vmem %s365, 24 [#allocation7]
        %v595 = vld [vmem:[%s594] sm:$0xff]
        %v596 = vld [vmem:[%s594 + $0x8] sm:$0xff]
        %v597 = vld [vmem:[%s594 + $0x10] sm:$0xff]
        %v598 = vmax.f32 %v591, %v595
        %v599 = vmax.f32 %v592, %v596
        %v600 = vmax.f32 %v593, %v597
        %v601 = vsub.f32 %v591, %v595
        %v602 = vsub.f32 %v592, %v596
        %v603 = vsub.f32 %v593, %v597
        %v604 = vand.u32 2147483647, %v601
        %v605 = vand.u32 2147483647, %v602
        %v606 = vand.u32 2147483647, %v603
        %v607 = vsub.f32 0.0, %v604
        %v608 = vsub.f32 0.0, %v605
        %v609 = vsub.f32 0.0, %v606
        %v610 = vmul.f32 %v607, 1.442695
        %v611 = vpow.pop %v610
        %v612 = vmul.f32 %v608, 1.442695
        %v613 = vpow.pop %v612
        %v614 = vmul.f32 %v609, 1.442695
        %v615 = vpow.pop %v614
        %v616 = vadd.f32 %v611, 1.0
        %v617 = vadd.f32 %v613, 1.0
        %v618 = vadd.f32 %v615, 1.0
        %v619 = vlog2.pop %v616
        %v620 = vmul.f32 %v619, 0.6931472
        %v621 = vlog2.pop %v617
        %v622 = vmul.f32 %v621, 0.6931472
        %v623 = vlog2.pop %v618
        %v624 = vmul.f32 %v623, 0.6931472
        %v625 = vadd.f32 %v598, %v620
        %v626 = vadd.f32 %v599, %v622
        %v627 = vadd.f32 %v600, %v624
        %v628 = vsel %vm434, %v595, %v591
        %v629 = vsel %vm435, %v596, %v592
        %v630 = vsel %vm436, %v597, %v593
        %v631 = vsub.f32 %v625, %v628
        %v632 = vsub.f32 %v626, %v629
        %v633 = vsub.f32 %v627, %v630
        %v634 = vsel %vm428, %v631, 0.0
        %v635 = vsel %vm429, %v632, 0.0
        %v636 = vsel %vm430, %v633, 0.0
        %v637 = vsel %vm434, 0.0, %v634
        %v638 = vsel %vm435, 0.0, %v635
        %v639 = vsel %vm436, 0.0, %v636
        %s643 = smul.f32 %s453, 3.0
        %s644 = smin.f32 %s643, 2999.0
        loop: start=0, step=1, limit=32
        $region53: #{tpu_custom_call.1} parent=35 // loop_pre_header
          _
        $region54: #{tpu_custom_call.1} parent=35 // loop_header
          %s646 = sphi 0, %s650
          %p647 = scmp.ge.s32.totalorder %s646, 32
          %s651 = sphi 0, %s679
          %s652 = sphi 2139095040, %s681
        $region55: #{tpu_custom_call.1} parent=35 // loop_header_branch
          %649 = sbr.rel (%p647) target = $region59
        $region56: #{tpu_custom_call.1} parent=35 // loop_body
          %s653 = ssub.s32 %s652, %s651
          %s654 = sadd.s32 %s653, 1
          %s655 = sshra.s32 %s654, 1
          %s656 = sadd.s32 %s651, %s655
          %v657 = vstv %s656
          %vm658 = vcmp.ge.s32.totalorder %v637, %v657
          %vm659 = vcmp.ge.s32.totalorder %v638, %v657
          %vm660 = vcmp.ge.s32.totalorder %v639, %v657
          %v661 = vsel %vm658, 1, 0
          %v662 = vsel %vm659, 1, 0
          %v663 = vsel %vm660, 1, 0
          %v664 = vcvt.s32.f32 %v661
          %v665 = vcvt.s32.f32 %v662
          %v666 = vcvt.s32.f32 %v663
          %v667 = vadd.f32 %v664, %v665
          %v668 = vadd.f32 %v667, %v666
          %669 = vadd.xlane.f32.xlu0 %v668
          %v670 = vpop.xlane.xlu0 %669
          %v671 = vrot.slane %v670, 4
          %v672 = vadd.f32 %v670, %v671
          %v673 = vrot.slane %v672, 2
          %v674 = vadd.f32 %v672, %v673
          %v675 = vrot.slane %v674, 1
          %v676 = vadd.f32 %v674, %v675
          %s677 = vtos %v676
          %p678 = scmp.ge.f32.partialorder %s677, %s644
          %s679 = scalar_select %p678, %s656, %s651
          %s680 = ssub.s32 %s656, 1
          %s681 = scalar_select %p678, %s652, %s680
        $region57: #{tpu_custom_call.1} parent=35 // loop_footer
          %s650 = sadd.s32 1, %s646
        $region58: #{tpu_custom_call.1} parent=35 // loop_footer_branch
          %645 = sbr.rel target = $region54
        $region59: #{tpu_custom_call.1} parent=35 // loop_exit
          _
        %v682 = vstv %s651
        %vm683 = vcmp.ge.s32.totalorder %v637, %v682
        %vm684 = vcmp.ge.s32.totalorder %v638, %v682
        %vm685 = vcmp.ge.s32.totalorder %v639, %v682
        %p686 = scmp.ge.f32.partialorder %s644, 1.0
        %s687 = scalar_select %p686, 1, 0
        %v688 = vstv %s687
        %vm689 = vcmp.eq.s32.totalorder %v688, 1
        %vm690 = vmand %vm683, %vm689
        %vm691 = vmand %vm684, %vm689
        %vm692 = vmand %vm685, %vm689
        %vm693 = vmor %vm434, %vm690
        %vm694 = vmor %vm435, %vm691
        %vm695 = vmor %vm436, %vm692
        %v696 = vsel %vm693, 1, 0
        %v697 = vsel %vm694, 1, 0
        %v698 = vsel %vm695, 1, 0
        %v699 = vcvt.s32.f32 %v696
        %v700 = vcvt.s32.f32 %v697
        %v701 = vcvt.s32.f32 %v698
        %v702 = vmul.f32 %v634, %v699
        %v703 = vmul.f32 %v635, %v700
        %v704 = vmul.f32 %v636, %v701
        %v705 = vadd.f32 %v702, %v703
        %v706 = vadd.f32 %v705, %v704
        %707 = vadd.xlane.f32.xlu0 %v706
        %v708 = vpop.xlane.xlu0 %707
        %v709 = vrot.slane %v708, 4
        %v710 = vadd.f32 %v708, %v709
        %v711 = vrot.slane %v710, 2
        %v712 = vadd.f32 %v710, %v711
        %v713 = vrot.slane %v712, 1
        %v714 = vadd.f32 %v712, %v713
        %s715 = vtos %v714
        %vm716 = vcmp.eq.s32.totalorder %v425, 0
        %vm717 = vcmp.eq.s32.totalorder %v425, 1
        %vm718 = vcmp.eq.s32.totalorder %v425, 2
        %v719 = vstv %s453
        %v720 = vsel %vm718, %v719, 0.0
        %v721 = vstv %s715
        %v722 = vsel %vm717, %v721, %v720
        %v723 = vstv %s590
        %v724 = vsel %vm716, %v723, %v722
        %725 = vst [vmem:[%s415] sm:$0xff] %v724
        %s726 = sand.u32 %s139, 1
        %s727 = scalar_lea.sflag [#allocation4], %s726
        %s728 = sand.u32 %s139, 1
        %s729 = smul.addr %s728, 8
        %s730 = scalar_lea.vmem [#allocation10], %s729
        // Predicated region
        $region60: #{tpu_custom_call.1} parent=35 // pred_check
          %p731 = pneg %p149
        $region61: #{tpu_custom_call.1} parent=35 // pred_check_branch
          %733 = sbr.rel (%p731) target = $region63
        $region62: #{tpu_custom_call.1} parent=35 // pred_region
          %735 = vsyncadd %s727, 0
          %s736 = smul.addr %s27, 8
          %s737 = scalar_lea.hbm %s4, %s736
          %s739 = sshll.u32 %s730, 4
          %s740 = int_to_ptr.vmem [resolvable:$true] %s739
          %s741 = sshll.u32 %s737, 4
          %s742 = int_to_ptr.hbm [resolvable:$true] %s741
          %744 = dma.vmem_to_hbm [thread:$0]  %s740, 128, %s742, %s727
        $region63: #{tpu_custom_call.1} parent=35 // pred_fallthru
          _
      $region36: #{tpu_custom_call.1} parent=5 // pred_fallthru
        _
      %p745 = scmp.le.s32.totalorder 2, %s22
      // Predicated region
      $region64: #{tpu_custom_call.1} parent=5 // pred_check
        %p746 = pneg %p745
      $region65: #{tpu_custom_call.1} parent=5 // pred_check_branch
        %748 = sbr.rel (%p746) target = $region67
      $region66: #{tpu_custom_call.1} parent=5 // pred_region
        %s749 = ssub.s32 %s22, 2
        // Predicated region
        $region68: #{tpu_custom_call.1} parent=66 // pred_check
          %p750 = pneg %p155
        $region69: #{tpu_custom_call.1} parent=66 // pred_check_branch
          %752 = sbr.rel (%p750) target = $region71
        $region70: #{tpu_custom_call.1} parent=66 // pred_region
          %s753 = sand.u32 %s140, 1
          %s754 = scalar_lea.sflag [#allocation4], %s753
          %s755 = sand.u32 %s140, 1
          %s756 = smul.addr %s755, 8
          %s757 = scalar_lea.vmem [#allocation10], %s756
          %759 = dma.done %s754, 128
        $region71: #{tpu_custom_call.1} parent=66 // pred_fallthru
          _
      $region67: #{tpu_custom_call.1} parent=5 // pred_fallthru
        _
    $region6: #{tpu_custom_call.1} parent=1 // loop_footer
      %s26 = sadd.s32 1, %s22
    $region7: #{tpu_custom_call.1} parent=1 // loop_footer_branch
      %21 = sbr.rel target = $region3
    $region8: #{tpu_custom_call.1} parent=1 // loop_exit
      _
    %760 = vsyncpa [#allocation3], 1
    %s761 = scalar_lea.sflag [#allocation3], 1
    %762 = vsyncpa %s761, 1
    %763 = vsyncpa [#allocation6], 1
    %s764 = scalar_lea.sflag [#allocation6], 1
    %765 = vsyncpa %s764, 1
    %766 = vsyncpa [#allocation9], 1
    %s767 = scalar_lea.sflag [#allocation9], 1
    %768 = vsyncpa %s767, 1
    %769 = vsyncpa [#allocation4], 1
    %s770 = scalar_lea.sflag [#allocation4], 1
    %771 = vsyncpa %s770, 1

</llo_original>
